<compile_context>
chip_gen: v5e
topology: v5e:2x2
jax: 0.10.0
libtpu: 0.0.40
codegen_flags: <defaults>
</compile_context>

<pallas_src>
import math

import jax
import jax.numpy as jnp
from jax.experimental import pallas as pl
from jax.experimental.pallas import tpu as pltpu


# ---------------------------------------------------------------------------
# Kernel 1: banded ("Toeplitz") matmul -- one MXU matmul per row tile.
#   x_ref : (TR, Lp*Cin)    padded input lines, flattened into the lane axis
#   b_ref : (Lp*Cin, L*Cout) banded conv weight (zero off the K-tap band)
#   o_ref : (TR, L*Cout)    output lines, flattened into the lane axis
# The K taps are folded into the band structure of b_ref, so the whole conv
# for this tile is a single lane-dense matmul (no tap grid, no scratch).
# ---------------------------------------------------------------------------
def _band_matmul_kernel(x_ref, b_ref, o_ref):
    o_ref[...] = jnp.dot(
        x_ref[...], b_ref[...], preferred_element_type=jnp.float32
    ).astype(o_ref.dtype)


# ---------------------------------------------------------------------------
# Kernel 2a: BN pass 1 -- per-lane sum / sum-of-squares, accumulated into the
# grid-resident outputs over an "arbitrary" reduction grid axis.
# ---------------------------------------------------------------------------
def _bn_stats_kernel(x_ref, sum_ref, ssq_ref):
    @pl.when(pl.program_id(0) == 0)
    def _():
        sum_ref[...] = jnp.zeros_like(sum_ref)
        ssq_ref[...] = jnp.zeros_like(ssq_ref)

    x = x_ref[...].astype(jnp.float32)
    sum_ref[...] += jnp.sum(x, axis=0, keepdims=True)
    ssq_ref[...] += jnp.sum(x * x, axis=0, keepdims=True)


# ---------------------------------------------------------------------------
# Kernel 2b: BN pass 2 -- fused affine normalize + ReLU (lane-dense, parallel).
# ---------------------------------------------------------------------------
def _bn_apply_relu_kernel(x_ref, scale_ref, shift_ref, o_ref):
    x = x_ref[...].astype(jnp.float32)
    y = x * scale_ref[...] + shift_ref[...]
    o_ref[...] = jnp.maximum(y, 0.0).astype(o_ref.dtype)


# ---------------------------------------------------------------------------
# Wrappers (layout plumbing only: pads, pure reshapes, one swap per conv).
# ---------------------------------------------------------------------------
def _choose_block_rows(n_rows, bytes_per_row, max_bytes=4 << 20, max_rows=1024):
    """Rows per grid block: multiple of 8 sublanes, >=2 blocks when possible
    (v7x megacore), and small enough that double-buffered in+out blocks stay
    far below the 32 MiB scoped-VMEM budget (v7x-safe)."""
    cap = max(8, min(max_rows, max_bytes // max(int(bytes_per_row), 1)))
    half = -(-n_rows // 2)                   # ceil(n_rows / 2)
    tr = min(cap, max(8, half))
    tr = max(8, (tr // 8) * 8)
    return n_rows if tr >= n_rows else tr


def _band_weight(w, L):
    """(K, Cin, Cout) tap weights -> (Lp*Cin, L*Cout) banded conv matrix with
    band[(l+t)*Cin + ci, l*Cout + co] = w[t, ci, co]."""
    K, Cin, Cout = w.shape
    Lp = L + K - 1
    lp = jnp.arange(Lp)[:, None]
    l = jnp.arange(L)[None, :]
    band = jnp.zeros((Lp, Cin, L, Cout), dtype=w.dtype)
    for t in range(K):                       # K is tiny and static
        m = (lp == l + t).astype(w.dtype)    # (Lp, L) diagonal mask, offset t
        band = band + m[:, None, :, None] * w[t][None, :, None, :]
    return band.reshape(Lp * Cin, L * Cout)


def _conv_innermost(x3, w):
    """'same' 1-D conv along the middle axis of x3:(P, L, Cin) (channels last)
    with taps w:(K, Cin, Cout), as one banded matmul per cdiv-tiled row block."""
    P, L, Cin = x3.shape
    K, _, Cout = w.shape
    assert K % 2 == 1, "kernel_size must be odd for 'same' sparse conv"
    pad = (K - 1) // 2
    Lp = L + 2 * pad

    xp = jnp.pad(x3, ((0, 0), (pad, pad), (0, 0))).reshape(P, Lp * Cin)
    band = _band_weight(w, L)

    tr = _choose_block_rows(P, (Lp * Cin + L * Cout) * 4)
    p_pad = -(-P // tr) * tr
    if p_pad != P:
        xp = jnp.pad(xp, ((0, p_pad - P), (0, 0)))

    out = pl.pallas_call(
        _band_matmul_kernel,
        out_shape=jax.ShapeDtypeStruct((p_pad, L * Cout), x3.dtype),
        grid=(p_pad // tr,),
        in_specs=[
            pl.BlockSpec((tr, Lp * Cin), lambda i: (i, 0)),
            pl.BlockSpec((Lp * Cin, L * Cout), lambda i: (0, 0)),
        ],
        out_specs=pl.BlockSpec((tr, L * Cout), lambda i: (i, 0)),
        compiler_params=pltpu.CompilerParams(
            dimension_semantics=("parallel",)
        ),
    )(xp, band)
    if p_pad != P:
        out = out[:P]
    return out.reshape(P, L, Cout)


def _bn_relu(flat, gamma, beta, eps=1e-5):
    """Training-mode BatchNorm (biased batch stats) + ReLU over flat:(M, C),
    as two tiled lane-dense passes over a (rows, lcm(C, 128)) view."""
    M, C = flat.shape
    lane_w = (C * 128) // math.gcd(C, 128)   # lane width: multiple of C and 128
    groups = lane_w // C
    total = M * C
    rows = -(-total // lane_w)
    tr = _choose_block_rows(rows, lane_w * 4 * 2)
    rows_pad = -(-rows // tr) * tr
    x1d = flat.reshape(-1)
    if rows_pad * lane_w != total:
        # trailing zeros contribute nothing to sum / sum-of-squares
        x1d = jnp.pad(x1d, (0, rows_pad * lane_w - total))
    xv = x1d.reshape(rows_pad, lane_w)
    grid = (rows_pad // tr,)

    # pass 1: tiled per-lane partial sums (reduction axis -> "arbitrary")
    lane_sum, lane_ssq = pl.pallas_call(
        _bn_stats_kernel,
        out_shape=(jax.ShapeDtypeStruct((1, lane_w), jnp.float32),
                   jax.ShapeDtypeStruct((1, lane_w), jnp.float32)),
        grid=grid,
        in_specs=[pl.BlockSpec((tr, lane_w), lambda i: (i, 0))],
        out_specs=(pl.BlockSpec((1, lane_w), lambda i: (0, 0)),
                   pl.BlockSpec((1, lane_w), lambda i: (0, 0))),
        compiler_params=pltpu.CompilerParams(
            dimension_semantics=("arbitrary",)
        ),
    )(xv)

    # tiny (lane_w,)-sized finalize: fold lanes -> channels, build scale/shift
    ch_sum = lane_sum.reshape(groups, C).sum(axis=0)
    ch_ssq = lane_ssq.reshape(groups, C).sum(axis=0)
    mean = ch_sum / M
    var = ch_ssq / M - mean * mean           # biased, matches BN training stats
    scale = gamma * jax.lax.rsqrt(var + eps)
    shift = beta - mean * scale
    scale_l = jnp.tile(scale, groups).reshape(1, lane_w)
    shift_l = jnp.tile(shift, groups).reshape(1, lane_w)

    # pass 2: normalize + ReLU ("parallel" -> shards across v7x TensorCores)
    y = pl.pallas_call(
        _bn_apply_relu_kernel,
        out_shape=jax.ShapeDtypeStruct((rows_pad, lane_w), flat.dtype),
        grid=grid,
        in_specs=[
            pl.BlockSpec((tr, lane_w), lambda i: (i, 0)),
            pl.BlockSpec((1, lane_w), lambda i: (0, 0)),
            pl.BlockSpec((1, lane_w), lambda i: (0, 0)),
        ],
        out_specs=pl.BlockSpec((tr, lane_w), lambda i: (i, 0)),
        compiler_params=pltpu.CompilerParams(
            dimension_semantics=("parallel",)
        ),
    )(xv, scale_l, shift_l)
    return y.reshape(-1)[:total].reshape(M, C)


@jax.jit
def sparse_conv3d_forward(x_ncdhw, w1, w2, w3, gamma, beta):
    """Forward of SparseConv3d(in_c, out_c, kernel_size=3, stride=1,
    normalization='batch', nonlinearity='relu', factorize=True, bias=False)
    on a dense voxel grid.  Input/Output layout is NCDHW (PyTorch)."""
    N, Cin, D, H, W = x_ncdhw.shape
    x = jnp.transpose(x_ncdhw, (0, 2, 3, 4, 1))          # NCDHW -> NDHWC

    # conv1: kernel (1,1,k) -> conv along W (already innermost-spatial; the
    # (N*D*H, W, C) view is a pure reshape, no copy).
    y = _conv_innermost(x.reshape(N * D * H, W, Cin), w1)
    c1 = w1.shape[2]
    y = y.reshape(N, D, H, W, c1)

    # conv2: kernel (1,k,1) -> conv along H.  One swap puts H innermost.
    # TODO(synk): this (and the next) layout swap could be folded into the
    # previous conv's output BlockSpec (transposed tile write) to save an HBM
    # round-trip, at the cost of tying the tile shape to the spatial extent.
    y = jnp.swapaxes(y, 2, 3)                            # (N, D, W, H, C)
    y = _conv_innermost(y.reshape(N * D * W, H, c1), w2)
    c2 = w2.shape[2]
    y = y.reshape(N, D, W, H, c2)

    # conv3: kernel (k,1,1) -> conv along D.  One swap puts D innermost.
    y = jnp.swapaxes(y, 1, 3)                            # (N, H, W, D, C)
    y = _conv_innermost(y.reshape(N * H * W, D, c2), w3)
    c3 = w3.shape[2]

    # spnn.BatchNorm (training batch stats) + spnn.ReLU, layout-agnostic.
    y = _bn_relu(y.reshape(N * H * W * D, c3), gamma, beta)
    y = y.reshape(N, H, W, D, c3)
    return jnp.transpose(y, (0, 4, 3, 1, 2))             # back to NCDHW


# ---------------------------------------------------------------------------
# Pure-JAX reference for verification.
# ---------------------------------------------------------------------------
def _reference(x_ncdhw, w1, w2, w3, gamma, beta):
    x = jnp.transpose(x_ncdhw, (0, 2, 3, 4, 1)).astype(jnp.float32)

    def conv_axis(xx, w, axis):
        K = w.shape[0]
        pad = (K - 1) // 2
        cfg = [(0, 0)] * 5
        cfg[axis] = (pad, pad)
        xp = jnp.pad(xx, cfg)
        L = xx.shape[axis]
        out = 0.0
        for t in range(K):
            sl = [slice(None)] * 5
            sl[axis] = slice(t, t + L)
            out = out + jnp.einsum("...c,cd->...d", xp[tuple(sl)], w[t])
        return out

    out = conv_axis(x, w1, 3)
    out = conv_axis(out, w2, 2)
    out = conv_axis(out, w3, 1)
    mean = out.mean(axis=(0, 1, 2, 3), keepdims=True)
    var = ((out - mean) ** 2).mean(axis=(0, 1, 2, 3), keepdims=True)
    y = (out - mean) * jax.lax.rsqrt(var + 1e-5) * gamma + beta
    y = jnp.maximum(y, 0.0)
    return jnp.transpose(y, (0, 4, 1, 2, 3))


if __name__ == "__main__":
    # Small deterministic setup: batch=2, in_channels=4, out_channels=8,
    # spatial grid 8x8x8, kernel_size=3, stride=1.
    N, C_IN, C_OUT, S, K = 2, 4, 8, 8, 3
    key = jax.random.PRNGKey(0)
    kx, k1, k2, k3 = jax.random.split(key, 4)

    x = jax.random.normal(kx, (N, C_IN, S, S, S), dtype=jnp.float32)

    # Deterministic synthetic conv weights (spnn.Conv3d, bias=False since
    # normalization == 'batch').  Shapes: (taps, Cin, Cout).
    w1 = 0.1 * jax.random.normal(k1, (K, C_IN, C_IN), dtype=jnp.float32)
    w2 = 0.1 * jax.random.normal(k2, (K, C_IN, C_IN), dtype=jnp.float32)
    w3 = 0.1 * jax.random.normal(k3, (K, C_IN, C_OUT), dtype=jnp.float32)

    # BatchNorm affine params at their PyTorch defaults.
    gamma = jnp.ones((C_OUT,), dtype=jnp.float32)
    beta = jnp.zeros((C_OUT,), dtype=jnp.float32)

    out = sparse_conv3d_forward(x, w1, w2, w3, gamma, beta)
    out = jax.block_until_ready(out)

    ref = _reference(x, w1, w2, w3, gamma, beta)
    assert out.shape == (N, C_OUT, S, S, S), out.shape
    assert jnp.allclose(out, ref, atol=1e-3, rtol=1e-3), (
        float(jnp.max(jnp.abs(out - ref)))
    )

    print("KERNEL_OK")
</pallas_src>

<mosaic_0001>
module attributes {stable_mosaic.version = 11 : i64} {
  func.func @_band_matmul_kernel(%arg0: i32, %arg1: memref<64x40xf32, #tpu.memory_space<vmem>>, %arg2: memref<40x32xf32, #tpu.memory_space<vmem>>, %arg3: memref<64x32xf32, #tpu.memory_space<vmem>>) attributes {dimension_semantics = [#tpu.dimension_semantics<parallel>], iteration_bounds = array<i64: 2>, scalar_prefetch = 0 : i64, scratch_operands = 0 : i64, tpu.core_type = #tpu.core_type<tc>, window_params = [{transform_indices = @transform_0, window_bounds = array<i64: 64, 40>}, {pipeline_mode = #tpu.pipeline_mode<synchronous>, transform_indices = @transform_1, window_bounds = array<i64: 40, 32>}, {transform_indices = @transform_2, window_bounds = array<i64: 64, 32>}]} {
    %c0 = arith.constant 0 : index
    %c0_0 = arith.constant 0 : index
    %0 = vector.load %arg1[%c0, %c0_0] : memref<64x40xf32, #tpu.memory_space<vmem>>, vector<64x40xf32>
    %c0_1 = arith.constant 0 : index
    %c0_2 = arith.constant 0 : index
    %1 = vector.load %arg2[%c0_1, %c0_2] : memref<40x32xf32, #tpu.memory_space<vmem>>, vector<40x32xf32>
    %cst = arith.constant dense<0.000000e+00> : vector<64x32xf32>
    %2 = tpu.matmul %0, %1, %cst {dimension_numbers = #tpu.dot_dimension_numbers<[1], [0], [0], [1], [0, 0, 1, 1], [], []>} : vector<64x40xf32>, vector<40x32xf32>, vector<64x32xf32> -> vector<64x32xf32>
    %c0_3 = arith.constant 0 : index
    %c0_4 = arith.constant 0 : index
    %3 = vector.load %arg3[%c0_3, %c0_4] : memref<64x32xf32, #tpu.memory_space<vmem>>, vector<64x32xf32>
    tpu.vector_store %arg3[%c0_3, %c0_4], %2 {strides = array<i32>} : memref<64x32xf32, #tpu.memory_space<vmem>>, vector<64x32xf32>,
    return
  }
  func.func @transform_0(%arg0: i32) -> (i32, i32) {
    %c0_i32 = arith.constant 0 : i32
    %c0_i32_0 = arith.constant 0 : i32
    return %arg0, %c0_i32 : i32, i32
  }
  func.func @transform_1(%arg0: i32) -> (i32, i32) {
    %c0_i32 = arith.constant 0 : i32
    %c0_i32_0 = arith.constant 0 : i32
    %c0_i32_1 = arith.constant 0 : i32
    return %c0_i32, %c0_i32_0 : i32, i32
  }
  func.func @transform_2(%arg0: i32) -> (i32, i32) {
    %c0_i32 = arith.constant 0 : i32
    %c0_i32_0 = arith.constant 0 : i32
    return %arg0, %c0_i32 : i32, i32
  }
}

module attributes {stable_mosaic.version = 11 : i64} {
  func.func @_band_matmul_kernel(%arg0: i32, %arg1: memref<64x40xf32, #tpu.memory_space<vmem>>, %arg2: memref<40x64xf32, #tpu.memory_space<vmem>>, %arg3: memref<64x64xf32, #tpu.memory_space<vmem>>) attributes {dimension_semantics = [#tpu.dimension_semantics<parallel>], iteration_bounds = array<i64: 2>, scalar_prefetch = 0 : i64, scratch_operands = 0 : i64, tpu.core_type = #tpu.core_type<tc>, window_params = [{transform_indices = @transform_0, window_bounds = array<i64: 64, 40>}, {pipeline_mode = #tpu.pipeline_mode<synchronous>, transform_indices = @transform_1, window_bounds = array<i64: 40, 64>}, {transform_indices = @transform_2, window_bounds = array<i64: 64, 64>}]} {
    %c0 = arith.constant 0 : index
    %c0_0 = arith.constant 0 : index
    %0 = vector.load %arg1[%c0, %c0_0] : memref<64x40xf32, #tpu.memory_space<vmem>>, vector<64x40xf32>
    %c0_1 = arith.constant 0 : index
    %c0_2 = arith.constant 0 : index
    %1 = vector.load %arg2[%c0_1, %c0_2] : memref<40x64xf32, #tpu.memory_space<vmem>>, vector<40x64xf32>
    %cst = arith.constant dense<0.000000e+00> : vector<64x64xf32>
    %2 = tpu.matmul %0, %1, %cst {dimension_numbers = #tpu.dot_dimension_numbers<[1], [0], [0], [1], [0, 0, 1, 1], [], []>} : vector<64x40xf32>, vector<40x64xf32>, vector<64x64xf32> -> vector<64x64xf32>
    %c0_3 = arith.constant 0 : index
    %c0_4 = arith.constant 0 : index
    %3 = vector.load %arg3[%c0_3, %c0_4] : memref<64x64xf32, #tpu.memory_space<vmem>>, vector<64x64xf32>
    tpu.vector_store %arg3[%c0_3, %c0_4], %2 {strides = array<i32>} : memref<64x64xf32, #tpu.memory_space<vmem>>, vector<64x64xf32>,
    return
  }
  func.func @transform_0(%arg0: i32) -> (i32, i32) {
    %c0_i32 = arith.constant 0 : i32
    %c0_i32_0 = arith.constant 0 : i32
    return %arg0, %c0_i32 : i32, i32
  }
  func.func @transform_1(%arg0: i32) -> (i32, i32) {
    %c0_i32 = arith.constant 0 : i32
    %c0_i32_0 = arith.constant 0 : i32
    %c0_i32_1 = arith.constant 0 : i32
    return %c0_i32, %c0_i32_0 : i32, i32
  }
  func.func @transform_2(%arg0: i32) -> (i32, i32) {
    %c0_i32 = arith.constant 0 : i32
    %c0_i32_0 = arith.constant 0 : i32
    return %arg0, %c0_i32 : i32, i32
  }
}

module attributes {stable_mosaic.version = 11 : i64} {
  func.func @_bn_stats_kernel(%arg0: i32, %arg1: memref<32x128xf32, #tpu.memory_space<vmem>>, %arg2: memref<1x128xf32, #tpu.memory_space<vmem>>, %arg3: memref<1x128xf32, #tpu.memory_space<vmem>>) attributes {dimension_semantics = [#tpu.dimension_semantics<arbitrary>], iteration_bounds = array<i64: 2>, scalar_prefetch = 0 : i64, scratch_operands = 0 : i64, tpu.core_type = #tpu.core_type<tc>, window_params = [{transform_indices = @transform_0, window_bounds = array<i64: 32, 128>}, {pipeline_mode = #tpu.pipeline_mode<synchronous>, transform_indices = @transform_1, window_bounds = array<i64: 1, 128>}, {pipeline_mode = #tpu.pipeline_mode<synchronous>, transform_indices = @transform_2, window_bounds = array<i64: 1, 128>}]} {
    %c0_i32 = arith.constant 0 : i32
    %0 = arith.cmpi eq, %arg0, %c0_i32 : i32
    %1 = arith.extui %0 : i1 to i32
    %c0_i32_0 = arith.constant 0 : i32
    %2 = arith.cmpi ne, %1, %c0_i32_0 : i32
    scf.if %2 {
      %cst_11 = arith.constant 0.000000e+00 : f32
      %15 = vector.broadcast %cst_11 : f32 to vector<1x128xf32>
      %c0_12 = arith.constant 0 : index
      %c0_13 = arith.constant 0 : index
      %16 = vector.load %arg2[%c0_12, %c0_13] : memref<1x128xf32, #tpu.memory_space<vmem>>, vector<1x128xf32>
      tpu.vector_store %arg2[%c0_12, %c0_13], %15 {strides = array<i32>} : memref<1x128xf32, #tpu.memory_space<vmem>>, vector<1x128xf32>,
      %cst_14 = arith.constant 0.000000e+00 : f32
      %17 = vector.broadcast %cst_14 : f32 to vector<1x128xf32>
      %c0_15 = arith.constant 0 : index
      %c0_16 = arith.constant 0 : index
      %18 = vector.load %arg3[%c0_15, %c0_16] : memref<1x128xf32, #tpu.memory_space<vmem>>, vector<1x128xf32>
      tpu.vector_store %arg3[%c0_15, %c0_16], %17 {strides = array<i32>} : memref<1x128xf32, #tpu.memory_space<vmem>>, vector<1x128xf32>,
    } else {
    }
    %c0 = arith.constant 0 : index
    %c0_1 = arith.constant 0 : index
    %3 = vector.load %arg1[%c0, %c0_1] : memref<32x128xf32, #tpu.memory_space<vmem>>, vector<32x128xf32>
    %c0_2 = arith.constant 0 : index
    %c0_3 = arith.constant 0 : index
    %4 = vector.load %arg2[%c0_2, %c0_3] : memref<1x128xf32, #tpu.memory_space<vmem>>, vector<1x128xf32>
    %cst = arith.constant dense<0.000000e+00> : vector<128xf32>
    %5 = vector.multi_reduction <add>, %3, %cst [0] : vector<32x128xf32> to vector<128xf32>
    %6 = vector.shape_cast %5 : vector<128xf32> to vector<1x128xf32>
    %7 = arith.addf %4, %6 : vector<1x128xf32>
    %c0_4 = arith.constant 0 : index
    %c0_5 = arith.constant 0 : index
    %8 = vector.load %arg2[%c0_4, %c0_5] : memref<1x128xf32, #tpu.memory_space<vmem>>, vector<1x128xf32>
    tpu.vector_store %arg2[%c0_4, %c0_5], %7 {strides = array<i32>} : memref<1x128xf32, #tpu.memory_space<vmem>>, vector<1x128xf32>,
    %c0_6 = arith.constant 0 : index
    %c0_7 = arith.constant 0 : index
    %9 = vector.load %arg3[%c0_6, %c0_7] : memref<1x128xf32, #tpu.memory_space<vmem>>, vector<1x128xf32>
    %10 = arith.mulf %3, %3 : vector<32x128xf32>
    %cst_8 = arith.constant dense<0.000000e+00> : vector<128xf32>
    %11 = vector.multi_reduction <add>, %10, %cst_8 [0] : vector<32x128xf32> to vector<128xf32>
    %12 = vector.shape_cast %11 : vector<128xf32> to vector<1x128xf32>
    %13 = arith.addf %9, %12 : vector<1x128xf32>
    %c0_9 = arith.constant 0 : index
    %c0_10 = arith.constant 0 : index
    %14 = vector.load %arg3[%c0_9, %c0_10] : memref<1x128xf32, #tpu.memory_space<vmem>>, vector<1x128xf32>
    tpu.vector_store %arg3[%c0_9, %c0_10], %13 {strides = array<i32>} : memref<1x128xf32, #tpu.memory_space<vmem>>, vector<1x128xf32>,
    return
  }
  func.func @transform_0(%arg0: i32) -> (i32, i32) {
    %c0_i32 = arith.constant 0 : i32
    %c0_i32_0 = arith.constant 0 : i32
    return %arg0, %c0_i32 : i32, i32
  }
  func.func @transform_1(%arg0: i32) -> (i32, i32) {
    %c0_i32 = arith.constant 0 : i32
    %c0_i32_0 = arith.constant 0 : i32
    %c0_i32_1 = arith.constant 0 : i32
    return %c0_i32, %c0_i32_0 : i32, i32
  }
  func.func @transform_2(%arg0: i32) -> (i32, i32) {
    %c0_i32 = arith.constant 0 : i32
    %c0_i32_0 = arith.constant 0 : i32
    %c0_i32_1 = arith.constant 0 : i32
    return %c0_i32, %c0_i32_0 : i32, i32
  }
}

module attributes {stable_mosaic.version = 11 : i64} {
  func.func @_bn_apply_relu_kernel(%arg0: i32, %arg1: memref<32x128xf32, #tpu.memory_space<vmem>>, %arg2: memref<1x128xf32, #tpu.memory_space<vmem>>, %arg3: memref<1x128xf32, #tpu.memory_space<vmem>>, %arg4: memref<32x128xf32, #tpu.memory_space<vmem>>) attributes {dimension_semantics = [#tpu.dimension_semantics<parallel>], iteration_bounds = array<i64: 2>, scalar_prefetch = 0 : i64, scratch_operands = 0 : i64, tpu.core_type = #tpu.core_type<tc>, window_params = [{transform_indices = @transform_0, window_bounds = array<i64: 32, 128>}, {pipeline_mode = #tpu.pipeline_mode<synchronous>, transform_indices = @transform_1, window_bounds = array<i64: 1, 128>}, {pipeline_mode = #tpu.pipeline_mode<synchronous>, transform_indices = @transform_2, window_bounds = array<i64: 1, 128>}, {transform_indices = @transform_3, window_bounds = array<i64: 32, 128>}]} {
    %c0 = arith.constant 0 : index
    %c0_0 = arith.constant 0 : index
    %0 = vector.load %arg1[%c0, %c0_0] : memref<32x128xf32, #tpu.memory_space<vmem>>, vector<32x128xf32>
    %c0_1 = arith.constant 0 : index
    %c0_2 = arith.constant 0 : index
    %1 = vector.load %arg2[%c0_1, %c0_2] : memref<1x128xf32, #tpu.memory_space<vmem>>, vector<1x128xf32>
    %2 = vector.broadcast %1 : vector<1x128xf32> to vector<32x128xf32>
    %3 = arith.mulf %0, %2 : vector<32x128xf32>
    %c0_3 = arith.constant 0 : index
    %c0_4 = arith.constant 0 : index
    %4 = vector.load %arg3[%c0_3, %c0_4] : memref<1x128xf32, #tpu.memory_space<vmem>>, vector<1x128xf32>
    %5 = vector.broadcast %4 : vector<1x128xf32> to vector<32x128xf32>
    %6 = arith.addf %3, %5 : vector<32x128xf32>
    %cst = arith.constant 0.000000e+00 : f32
    %7 = vector.broadcast %cst : f32 to vector<32x128xf32>
    %8 = arith.maximumf %6, %7 : vector<32x128xf32>
    %c0_5 = arith.constant 0 : index
    %c0_6 = arith.constant 0 : index
    %9 = vector.load %arg4[%c0_5, %c0_6] : memref<32x128xf32, #tpu.memory_space<vmem>>, vector<32x128xf32>
    tpu.vector_store %arg4[%c0_5, %c0_6], %8 {strides = array<i32>} : memref<32x128xf32, #tpu.memory_space<vmem>>, vector<32x128xf32>,
    return
  }
  func.func @transform_0(%arg0: i32) -> (i32, i32) {
    %c0_i32 = arith.constant 0 : i32
    %c0_i32_0 = arith.constant 0 : i32
    return %arg0, %c0_i32 : i32, i32
  }
  func.func @transform_1(%arg0: i32) -> (i32, i32) {
    %c0_i32 = arith.constant 0 : i32
    %c0_i32_0 = arith.constant 0 : i32
    %c0_i32_1 = arith.constant 0 : i32
    return %c0_i32, %c0_i32_0 : i32, i32
  }
  func.func @transform_2(%arg0: i32) -> (i32, i32) {
    %c0_i32 = arith.constant 0 : i32
    %c0_i32_0 = arith.constant 0 : i32
    %c0_i32_1 = arith.constant 0 : i32
    return %c0_i32, %c0_i32_0 : i32, i32
  }
  func.func @transform_3(%arg0: i32) -> (i32, i32) {
    %c0_i32 = arith.constant 0 : i32
    %c0_i32_0 = arith.constant 0 : i32
    return %arg0, %c0_i32 : i32, i32
  }
}

</mosaic_0001>

<llo_original>
// kernel: sparse_conv3d_forward.5
$region0: #{sparse_conv3d_forward.5}
  #allocation0 [shape = 'u32[]', space=smem, size = 0x4, offset = 0x4, fixed_abs, tag = 'smem constant byte address 0x4 - core index']
  #allocation1 [shape = 'u32[72,128]{1,0:T(1,128)}', space=vmem, size = 0x9000, scoped, tag = 'internal scratch']
  %s0 = inlined_call_operand.vmem [shape: f32[128,40], index: 0, kind: input, shape index: {}]
  %s1 = inlined_call_operand.vmem [shape: f32[40,32], index: 1, kind: input, shape index: {}]
  %s2 = inlined_call_operand.vmem [shape: f32[128,32], index: 2, kind: output, shape index: {}]
  %s3 = sld [smem:[#allocation0]]
  $region41: #{sparse_conv3d_forward.5} parent=0
    _
  %s5 = ssub.s32 1, %s3
  %s6 = scalar_select 0, %s5, %s3
  loop: start=0, step=1, limit=4
  $region2: #{sparse_conv3d_forward.5} parent=0 // loop_pre_header
    _
  $region3: #{sparse_conv3d_forward.5} parent=0 // loop_header
    %s8 = sphi 0, %s12
    %p9 = scmp.ge.s32.totalorder %s8, 4
    %s18 = sphi 0, %s20
    %s21 = sphi 0, %s18
    %s22 = sphi 0, %s21
    %s38 = sphi 0, %s22
    %s42 = sphi 0, %s42
    %s44 = sphi 0, %s42
    %s45 = sphi 0, %s44
    %s59 = sphi 0, %s45
    %s65 = sphi 0, %s67
    %s68 = sphi 0, %s65
    %s69 = sphi 0, %s68
    %s85 = sphi 0, %s69
  $region4: #{sparse_conv3d_forward.5} parent=0 // loop_header_branch
    %11 = sbr.rel (%p9) target = $region8
  $region5: #{sparse_conv3d_forward.5} parent=0 // loop_body
    %s13 = ssub.s32 %s8, 1
    %s14 = ssub.s32 %s8, 2
    %s15 = sadd.s32 %s8, 1
    %s16 = ssub.s32 %s8, %s15
    %p17 = scmp.eq.s32.totalorder %s16, 0
    %s19 = sadd.s32 %s18, 1
    %s20 = scalar_select %p17, %s18, %s19
    %p23 = pneg %p17
    %p24 = scmp.eq.s32.totalorder %s8, 1
    %p25 = por %p23, %p24
    %p26 = scmp.ne.s32.totalorder %s18, %s21
    %p27 = scmp.eq.s32.totalorder %s8, 0
    %p28 = por %p26, %p27
    %p29 = scmp.ne.s32.totalorder %s18, %s21
    %p30 = scmp.eq.s32.totalorder %s13, 1
    %p31 = por %p29, %p30
    %p32 = scmp.ne.s32.totalorder %s21, %s22
    %p33 = scmp.eq.s32.totalorder %s13, 0
    %p34 = por %p32, %p33
    %p35 = scmp.ne.s32.totalorder %s21, %s22
    %p36 = scmp.eq.s32.totalorder %s14, 1
    %p37 = por %p35, %p36
    %p39 = scmp.ne.s32.totalorder %s22, %s38
    %p40 = scmp.eq.s32.totalorder %s14, 0
    %p41 = por %p39, %p40
    %s43 = sadd.s32 %s42, 1
    %p46 = scmp.eq.s32.totalorder %s8, 1
    %p47 = scmp.ne.s32.totalorder %s42, %s44
    %p48 = scmp.eq.s32.totalorder %s8, 0
    %p49 = por %p47, %p48
    %p50 = scmp.ne.s32.totalorder %s42, %s44
    %p51 = scmp.eq.s32.totalorder %s13, 1
    %p52 = por %p50, %p51
    %p53 = scmp.ne.s32.totalorder %s44, %s45
    %p54 = scmp.eq.s32.totalorder %s13, 0
    %p55 = por %p53, %p54
    %p56 = scmp.ne.s32.totalorder %s44, %s45
    %p57 = scmp.eq.s32.totalorder %s14, 1
    %p58 = por %p56, %p57
    %p60 = scmp.ne.s32.totalorder %s45, %s59
    %p61 = scmp.eq.s32.totalorder %s14, 0
    %p62 = por %p60, %p61
    %s63 = ssub.s32 %s8, %s15
    %p64 = scmp.eq.s32.totalorder %s63, 0
    %s66 = sadd.s32 %s65, 1
    %s67 = scalar_select %p64, %s65, %s66
    %p70 = pneg %p64
    %p71 = scmp.eq.s32.totalorder %s8, 1
    %p72 = por %p70, %p71
    %p73 = scmp.ne.s32.totalorder %s65, %s68
    %p74 = scmp.eq.s32.totalorder %s8, 0
    %p75 = por %p73, %p74
    %p76 = scmp.ne.s32.totalorder %s65, %s68
    %p77 = scmp.eq.s32.totalorder %s13, 1
    %p78 = por %p76, %p77
    %p79 = scmp.ne.s32.totalorder %s68, %s69
    %p80 = scmp.eq.s32.totalorder %s13, 0
    %p81 = por %p79, %p80
    %p82 = scmp.ne.s32.totalorder %s68, %s69
    %p83 = scmp.eq.s32.totalorder %s14, 1
    %p84 = por %p82, %p83
    %p86 = scmp.ne.s32.totalorder %s69, %s85
    %p87 = scmp.eq.s32.totalorder %s14, 0
    %p88 = por %p86, %p87
    %p89 = scmp.le.s32.totalorder 1, %s8
    %p90 = scmp.lt.s32.totalorder %s8, 3
    %p91 = pnand %p89, %p90
    %p92 = pneg %p91
    // Predicated region
    $region9: #{sparse_conv3d_forward.5} parent=5 // pred_check
      _
    $region10: #{sparse_conv3d_forward.5} parent=5 // pred_check_branch
      %94 = sbr.rel (%p91) target = $region12
    $region11: #{sparse_conv3d_forward.5} parent=5 // pred_region
      %s95 = ssub.s32 %s8, 1
      // Predicated region
      $region13: #{sparse_conv3d_forward.5} parent=11 // pred_check
        %p96 = pneg %p55
      $region14: #{sparse_conv3d_forward.5} parent=11 // pred_check_branch
        %98 = sbr.rel (%p96) target = $region16
      $region15: #{sparse_conv3d_forward.5} parent=11 // pred_region
        _
      $region16: #{sparse_conv3d_forward.5} parent=11 // pred_fallthru
        _
    $region12: #{sparse_conv3d_forward.5} parent=5 // pred_fallthru
      _
    %p99 = scmp.lt.s32.totalorder %s8, 2
    // Predicated region
    $region17: #{sparse_conv3d_forward.5} parent=5 // pred_check
      %p100 = pneg %p99
    $region18: #{sparse_conv3d_forward.5} parent=5 // pred_check_branch
      %102 = sbr.rel (%p100) target = $region20
    $region19: #{sparse_conv3d_forward.5} parent=5 // pred_region
      // Predicated region
      $region21: #{sparse_conv3d_forward.5} parent=19 // pred_check
        %p103 = pneg %p28
      $region22: #{sparse_conv3d_forward.5} parent=19 // pred_check_branch
        %105 = sbr.rel (%p103) target = $region24
      $region23: #{sparse_conv3d_forward.5} parent=19 // pred_region
        %s106 = smul.u32 8, %s8
        %p107 = scmp.lt.s32.totalorder %s106, 15
        %s108 = scalar_select %p107, %s106, 15
        %s109 = smul.addr %s108, 8
        %s110 = scalar_lea.vmem %s0, %s109
        %s111 = smul.u32 8, %s8
      $region24: #{sparse_conv3d_forward.5} parent=19 // pred_fallthru
        _
    $region20: #{sparse_conv3d_forward.5} parent=5 // pred_fallthru
      _
    %p112 = scmp.le.s32.totalorder 1, %s8
    %p113 = scmp.lt.s32.totalorder %s8, 3
    %p114 = pnand %p112, %p113
    %p115 = pneg %p114
    // Predicated region
    $region25: #{sparse_conv3d_forward.5} parent=5 // pred_check
      _
    $region26: #{sparse_conv3d_forward.5} parent=5 // pred_check_branch
      %117 = sbr.rel (%p114) target = $region28
    $region27: #{sparse_conv3d_forward.5} parent=5 // pred_region
      %s118 = ssub.s32 %s8, 1
      %s119 = smul.u32 8, %s13
      %p120 = scmp.lt.s32.totalorder %s119, 15
      %s121 = scalar_select %p120, %s119, 15
      %s122 = smul.addr %s121, 8
      %s123 = scalar_lea.vmem %s0, %s122
      %p124 = pneg %p34
      %p125 = pneg %p31
      %p126 = pneg %p55
      %p127 = pneg %p52
      %p128 = pneg %p81
      %p129 = pneg %p78
      %s130 = smul.u32 8, %s13
      %p131 = scmp.lt.s32.totalorder %s130, 15
      %s132 = scalar_select %p131, %s130, 15
      %s133 = smul.addr %s132, 8
      %s134 = scalar_lea.vmem %s2, %s133
      %s135 = smul.u32 8, %s13
      %p136 = scmp.lt.s32.totalorder %s135, 15
      %s137 = scalar_select %p136, %s135, 15
      %s138 = smul.addr %s137, 8
      %s139 = scalar_lea.vmem %s0, %s138
      %s140 = smul.u32 8, %s13
      %s141 = smul.u32 8, %s13
      %p142 = scmp.lt.s32.totalorder %s141, 15
      %s143 = scalar_select %p142, %s141, 15
      %s144 = smul.addr %s143, 8
      %s145 = scalar_lea.vmem %s2, %s144
      %s146 = smul.u32 8, %s13
      %v147 = vld [vmem:[%s139] sm:$0xff]
      %v148 = vld [vmem:[%s139 + $0x8] sm:$0xff]
      %v149 = vld [vmem:[%s139 + $0x10] sm:$0xff]
      %v150 = vld [vmem:[%s139 + $0x18] sm:$0xff]
      %v151 = vld [vmem:[%s139 + $0x20] sm:$0xff]
      %v152 = vld [vmem:[%s139 + $0x28] sm:$0xff]
      %v153 = vld [vmem:[%s139 + $0x30] sm:$0xff]
      %v154 = vld [vmem:[%s139 + $0x38] sm:$0xff]
      %v155 = vld [vmem:[%s1] sm:$0xff]
      %v156 = vld [vmem:[%s1 + $0x8] sm:$0xff]
      %v157 = vld [vmem:[%s1 + $0x10] sm:$0xff]
      %v158 = vld [vmem:[%s1 + $0x18] sm:$0xff]
      %v159 = vld [vmem:[%s1 + $0x20] sm:$0xff]
      %vm160 = vcmask 326656
      %v162 = vsel %vm160, %v147, 0
      %v165 = vsel %vm160, %v148, 0
      %v168 = vsel %vm160, %v149, 0
      %v171 = vsel %vm160, %v150, 0
      %v174 = vsel %vm160, %v151, 0
      %v177 = vsel %vm160, %v152, 0
      %v180 = vsel %vm160, %v153, 0
      %v183 = vsel %vm160, %v154, 0
      %185 = vmatpush.msra.mxu0 0.0
      %186 = vmatpush.msra.mxu0 0.0
      %187 = vmatpush.msra.mxu0 0.0
      %188 = vmatpush.msra.mxu0 0.0
      %189 = vmatpush.msra.mxu0 0.0
      %190 = vmatpush.msra.mxu0 0.0
      %191 = vmatpush.msra.mxu0 0.0
      %192 = vmatpush.msra.mxu0 0.0
      %193 = vmatpush.msra.mxu0 0.0
      %194 = vmatpush.msra.mxu0 0.0
      %195 = vmatpush.msra.mxu0 0.0
      %196 = vmatpush.msra.mxu0 %v159
      %197 = vmatpush.msra.mxu0 %v158
      %198 = vmatpush.msra.mxu0 %v157
      %199 = vmatpush.msra.mxu0 %v156
      %200 = vmatpush.msra.mxu0 %v155
      %201 = vmatmul.f32.gmra.mxu0 %v162
      %v202 = vpop.f32.mrf.mxu0
      %v203 = vadd.f32 0.0, %v202
      %204 = vmatmul.f32.gmra.mxu0 %v165
      %v205 = vpop.f32.mrf.mxu0
      %v206 = vadd.f32 0.0, %v205
      %207 = vmatmul.f32.gmra.mxu0 %v168
      %v208 = vpop.f32.mrf.mxu0
      %v209 = vadd.f32 0.0, %v208
      %210 = vmatmul.f32.gmra.mxu0 %v171
      %v211 = vpop.f32.mrf.mxu0
      %v212 = vadd.f32 0.0, %v211
      %213 = vmatmul.f32.gmra.mxu0 %v174
      %v214 = vpop.f32.mrf.mxu0
      %v215 = vadd.f32 0.0, %v214
      %216 = vmatmul.f32.gmra.mxu0 %v177
      %v217 = vpop.f32.mrf.mxu0
      %v218 = vadd.f32 0.0, %v217
      %219 = vmatmul.f32.gmra.mxu0 %v180
      %v220 = vpop.f32.mrf.mxu0
      %v221 = vadd.f32 0.0, %v220
      %222 = vmatmul.f32.gmra.mxu0 %v183
      %v223 = vpop.f32.mrf.mxu0
      %v224 = vadd.f32 0.0, %v223
      %225 = vdwg.mxu0
      %vm226 = vcmask 261120
      %227 = vst.msk [vmem:[%s145] sm:$0xff] %vm226, %v203
      %228 = vst.msk [vmem:[%s145 + $0x8] sm:$0xff] %vm226, %v206
      %229 = vst.msk [vmem:[%s145 + $0x10] sm:$0xff] %vm226, %v209
      %230 = vst.msk [vmem:[%s145 + $0x18] sm:$0xff] %vm226, %v212
      %231 = vst.msk [vmem:[%s145 + $0x20] sm:$0xff] %vm226, %v215
      %232 = vst.msk [vmem:[%s145 + $0x28] sm:$0xff] %vm226, %v218
      %233 = vst.msk [vmem:[%s145 + $0x30] sm:$0xff] %vm226, %v221
      %234 = vst.msk [vmem:[%s145 + $0x38] sm:$0xff] %vm226, %v224
      %s235 = smul.u32 8, %s13
      %p236 = scmp.lt.s32.totalorder %s235, 15
      %s237 = scalar_select %p236, %s235, 15
      %s238 = smul.addr %s237, 8
      %s239 = scalar_lea.vmem %s2, %s238
      // Predicated region
      $region29: #{sparse_conv3d_forward.5} parent=27 // pred_check
        %p240 = pneg %p78
      $region30: #{sparse_conv3d_forward.5} parent=27 // pred_check_branch
        %242 = sbr.rel (%p240) target = $region32
      $region31: #{sparse_conv3d_forward.5} parent=27 // pred_region
        %s243 = smul.u32 8, %s13
      $region32: #{sparse_conv3d_forward.5} parent=27 // pred_fallthru
        _
    $region28: #{sparse_conv3d_forward.5} parent=5 // pred_fallthru
      _
    %p244 = scmp.le.s32.totalorder 2, %s8
    // Predicated region
    $region33: #{sparse_conv3d_forward.5} parent=5 // pred_check
      %p245 = pneg %p244
    $region34: #{sparse_conv3d_forward.5} parent=5 // pred_check_branch
      %247 = sbr.rel (%p245) target = $region36
    $region35: #{sparse_conv3d_forward.5} parent=5 // pred_region
      %s248 = ssub.s32 %s8, 2
      // Predicated region
      $region37: #{sparse_conv3d_forward.5} parent=35 // pred_check
        %p249 = pneg %p84
      $region38: #{sparse_conv3d_forward.5} parent=35 // pred_check_branch
        %251 = sbr.rel (%p249) target = $region40
      $region39: #{sparse_conv3d_forward.5} parent=35 // pred_region
        %s252 = smul.u32 8, %s14
        %p253 = scmp.lt.s32.totalorder %s252, 15
        %s254 = scalar_select %p253, %s252, 15
        %s255 = smul.addr %s254, 8
        %s256 = scalar_lea.vmem %s2, %s255
      $region40: #{sparse_conv3d_forward.5} parent=35 // pred_fallthru
        _
    $region36: #{sparse_conv3d_forward.5} parent=5 // pred_fallthru
      _
  $region6: #{sparse_conv3d_forward.5} parent=0 // loop_footer
    %s12 = sadd.s32 1, %s8
  $region7: #{sparse_conv3d_forward.5} parent=0 // loop_footer_branch
    %7 = sbr.rel target = $region3
  $region8: #{sparse_conv3d_forward.5} parent=0 // loop_exit
    _

// kernel: sparse_conv3d_forward.7
$region0: #{sparse_conv3d_forward.7}
  #allocation0 [shape = 'u32[]', space=smem, size = 0x4, offset = 0x4, fixed_abs, tag = 'smem constant byte address 0x4 - core index']
  #allocation1 [shape = 'u32[72,128]{1,0:T(1,128)}', space=vmem, size = 0x9000, scoped, tag = 'internal scratch']
  %s0 = inlined_call_operand.vmem [shape: f32[128,40], index: 0, kind: input, shape index: {}]
  %s1 = inlined_call_operand.vmem [shape: f32[40,64], index: 1, kind: input, shape index: {}]
  %s2 = inlined_call_operand.vmem [shape: f32[128,64], index: 2, kind: output, shape index: {}]
  %s3 = sld [smem:[#allocation0]]
  $region41: #{sparse_conv3d_forward.7} parent=0
    _
  %s5 = ssub.s32 1, %s3
  %s6 = scalar_select 0, %s5, %s3
  loop: start=0, step=1, limit=4
  $region2: #{sparse_conv3d_forward.7} parent=0 // loop_pre_header
    _
  $region3: #{sparse_conv3d_forward.7} parent=0 // loop_header
    %s8 = sphi 0, %s12
    %p9 = scmp.ge.s32.totalorder %s8, 4
    %s18 = sphi 0, %s20
    %s21 = sphi 0, %s18
    %s22 = sphi 0, %s21
    %s38 = sphi 0, %s22
    %s42 = sphi 0, %s42
    %s44 = sphi 0, %s42
    %s45 = sphi 0, %s44
    %s59 = sphi 0, %s45
    %s65 = sphi 0, %s67
    %s68 = sphi 0, %s65
    %s69 = sphi 0, %s68
    %s85 = sphi 0, %s69
  $region4: #{sparse_conv3d_forward.7} parent=0 // loop_header_branch
    %11 = sbr.rel (%p9) target = $region8
  $region5: #{sparse_conv3d_forward.7} parent=0 // loop_body
    %s13 = ssub.s32 %s8, 1
    %s14 = ssub.s32 %s8, 2
    %s15 = sadd.s32 %s8, 1
    %s16 = ssub.s32 %s8, %s15
    %p17 = scmp.eq.s32.totalorder %s16, 0
    %s19 = sadd.s32 %s18, 1
    %s20 = scalar_select %p17, %s18, %s19
    %p23 = pneg %p17
    %p24 = scmp.eq.s32.totalorder %s8, 1
    %p25 = por %p23, %p24
    %p26 = scmp.ne.s32.totalorder %s18, %s21
    %p27 = scmp.eq.s32.totalorder %s8, 0
    %p28 = por %p26, %p27
    %p29 = scmp.ne.s32.totalorder %s18, %s21
    %p30 = scmp.eq.s32.totalorder %s13, 1
    %p31 = por %p29, %p30
    %p32 = scmp.ne.s32.totalorder %s21, %s22
    %p33 = scmp.eq.s32.totalorder %s13, 0
    %p34 = por %p32, %p33
    %p35 = scmp.ne.s32.totalorder %s21, %s22
    %p36 = scmp.eq.s32.totalorder %s14, 1
    %p37 = por %p35, %p36
    %p39 = scmp.ne.s32.totalorder %s22, %s38
    %p40 = scmp.eq.s32.totalorder %s14, 0
    %p41 = por %p39, %p40
    %s43 = sadd.s32 %s42, 1
    %p46 = scmp.eq.s32.totalorder %s8, 1
    %p47 = scmp.ne.s32.totalorder %s42, %s44
    %p48 = scmp.eq.s32.totalorder %s8, 0
    %p49 = por %p47, %p48
    %p50 = scmp.ne.s32.totalorder %s42, %s44
    %p51 = scmp.eq.s32.totalorder %s13, 1
    %p52 = por %p50, %p51
    %p53 = scmp.ne.s32.totalorder %s44, %s45
    %p54 = scmp.eq.s32.totalorder %s13, 0
    %p55 = por %p53, %p54
    %p56 = scmp.ne.s32.totalorder %s44, %s45
    %p57 = scmp.eq.s32.totalorder %s14, 1
    %p58 = por %p56, %p57
    %p60 = scmp.ne.s32.totalorder %s45, %s59
    %p61 = scmp.eq.s32.totalorder %s14, 0
    %p62 = por %p60, %p61
    %s63 = ssub.s32 %s8, %s15
    %p64 = scmp.eq.s32.totalorder %s63, 0
    %s66 = sadd.s32 %s65, 1
    %s67 = scalar_select %p64, %s65, %s66
    %p70 = pneg %p64
    %p71 = scmp.eq.s32.totalorder %s8, 1
    %p72 = por %p70, %p71
    %p73 = scmp.ne.s32.totalorder %s65, %s68
    %p74 = scmp.eq.s32.totalorder %s8, 0
    %p75 = por %p73, %p74
    %p76 = scmp.ne.s32.totalorder %s65, %s68
    %p77 = scmp.eq.s32.totalorder %s13, 1
    %p78 = por %p76, %p77
    %p79 = scmp.ne.s32.totalorder %s68, %s69
    %p80 = scmp.eq.s32.totalorder %s13, 0
    %p81 = por %p79, %p80
    %p82 = scmp.ne.s32.totalorder %s68, %s69
    %p83 = scmp.eq.s32.totalorder %s14, 1
    %p84 = por %p82, %p83
    %p86 = scmp.ne.s32.totalorder %s69, %s85
    %p87 = scmp.eq.s32.totalorder %s14, 0
    %p88 = por %p86, %p87
    %p89 = scmp.le.s32.totalorder 1, %s8
    %p90 = scmp.lt.s32.totalorder %s8, 3
    %p91 = pnand %p89, %p90
    %p92 = pneg %p91
    // Predicated region
    $region9: #{sparse_conv3d_forward.7} parent=5 // pred_check
      _
    $region10: #{sparse_conv3d_forward.7} parent=5 // pred_check_branch
      %94 = sbr.rel (%p91) target = $region12
    $region11: #{sparse_conv3d_forward.7} parent=5 // pred_region
      %s95 = ssub.s32 %s8, 1
      // Predicated region
      $region13: #{sparse_conv3d_forward.7} parent=11 // pred_check
        %p96 = pneg %p55
      $region14: #{sparse_conv3d_forward.7} parent=11 // pred_check_branch
        %98 = sbr.rel (%p96) target = $region16
      $region15: #{sparse_conv3d_forward.7} parent=11 // pred_region
        _
      $region16: #{sparse_conv3d_forward.7} parent=11 // pred_fallthru
        _
    $region12: #{sparse_conv3d_forward.7} parent=5 // pred_fallthru
      _
    %p99 = scmp.lt.s32.totalorder %s8, 2
    // Predicated region
    $region17: #{sparse_conv3d_forward.7} parent=5 // pred_check
      %p100 = pneg %p99
    $region18: #{sparse_conv3d_forward.7} parent=5 // pred_check_branch
      %102 = sbr.rel (%p100) target = $region20
    $region19: #{sparse_conv3d_forward.7} parent=5 // pred_region
      // Predicated region
      $region21: #{sparse_conv3d_forward.7} parent=19 // pred_check
        %p103 = pneg %p28
      $region22: #{sparse_conv3d_forward.7} parent=19 // pred_check_branch
        %105 = sbr.rel (%p103) target = $region24
      $region23: #{sparse_conv3d_forward.7} parent=19 // pred_region
        %s106 = smul.u32 8, %s8
        %p107 = scmp.lt.s32.totalorder %s106, 15
        %s108 = scalar_select %p107, %s106, 15
        %s109 = smul.addr %s108, 8
        %s110 = scalar_lea.vmem %s0, %s109
        %s111 = smul.u32 8, %s8
      $region24: #{sparse_conv3d_forward.7} parent=19 // pred_fallthru
        _
    $region20: #{sparse_conv3d_forward.7} parent=5 // pred_fallthru
      _
    %p112 = scmp.le.s32.totalorder 1, %s8
    %p113 = scmp.lt.s32.totalorder %s8, 3
    %p114 = pnand %p112, %p113
    %p115 = pneg %p114
    // Predicated region
    $region25: #{sparse_conv3d_forward.7} parent=5 // pred_check
      _
    $region26: #{sparse_conv3d_forward.7} parent=5 // pred_check_branch
      %117 = sbr.rel (%p114) target = $region28
    $region27: #{sparse_conv3d_forward.7} parent=5 // pred_region
      %s118 = ssub.s32 %s8, 1
      %s119 = smul.u32 8, %s13
      %p120 = scmp.lt.s32.totalorder %s119, 15
      %s121 = scalar_select %p120, %s119, 15
      %s122 = smul.addr %s121, 8
      %s123 = scalar_lea.vmem %s0, %s122
      %p124 = pneg %p34
      %p125 = pneg %p31
      %p126 = pneg %p55
      %p127 = pneg %p52
      %p128 = pneg %p81
      %p129 = pneg %p78
      %s130 = smul.u32 8, %s13
      %p131 = scmp.lt.s32.totalorder %s130, 15
      %s132 = scalar_select %p131, %s130, 15
      %s133 = smul.addr %s132, 8
      %s134 = scalar_lea.vmem %s2, %s133
      %s135 = smul.u32 8, %s13
      %p136 = scmp.lt.s32.totalorder %s135, 15
      %s137 = scalar_select %p136, %s135, 15
      %s138 = smul.addr %s137, 8
      %s139 = scalar_lea.vmem %s0, %s138
      %s140 = smul.u32 8, %s13
      %s141 = smul.u32 8, %s13
      %p142 = scmp.lt.s32.totalorder %s141, 15
      %s143 = scalar_select %p142, %s141, 15
      %s144 = smul.addr %s143, 8
      %s145 = scalar_lea.vmem %s2, %s144
      %s146 = smul.u32 8, %s13
      %v147 = vld [vmem:[%s139] sm:$0xff]
      %v148 = vld [vmem:[%s139 + $0x8] sm:$0xff]
      %v149 = vld [vmem:[%s139 + $0x10] sm:$0xff]
      %v150 = vld [vmem:[%s139 + $0x18] sm:$0xff]
      %v151 = vld [vmem:[%s139 + $0x20] sm:$0xff]
      %v152 = vld [vmem:[%s139 + $0x28] sm:$0xff]
      %v153 = vld [vmem:[%s139 + $0x30] sm:$0xff]
      %v154 = vld [vmem:[%s139 + $0x38] sm:$0xff]
      %v155 = vld [vmem:[%s1] sm:$0xff]
      %v156 = vld [vmem:[%s1 + $0x8] sm:$0xff]
      %v157 = vld [vmem:[%s1 + $0x10] sm:$0xff]
      %v158 = vld [vmem:[%s1 + $0x18] sm:$0xff]
      %v159 = vld [vmem:[%s1 + $0x20] sm:$0xff]
      %vm160 = vcmask 326656
      %v162 = vsel %vm160, %v147, 0
      %v165 = vsel %vm160, %v148, 0
      %v168 = vsel %vm160, %v149, 0
      %v171 = vsel %vm160, %v150, 0
      %v174 = vsel %vm160, %v151, 0
      %v177 = vsel %vm160, %v152, 0
      %v180 = vsel %vm160, %v153, 0
      %v183 = vsel %vm160, %v154, 0
      %185 = vmatpush.msra.mxu0 0.0
      %186 = vmatpush.msra.mxu0 0.0
      %187 = vmatpush.msra.mxu0 0.0
      %188 = vmatpush.msra.mxu0 0.0
      %189 = vmatpush.msra.mxu0 0.0
      %190 = vmatpush.msra.mxu0 0.0
      %191 = vmatpush.msra.mxu0 0.0
      %192 = vmatpush.msra.mxu0 0.0
      %193 = vmatpush.msra.mxu0 0.0
      %194 = vmatpush.msra.mxu0 0.0
      %195 = vmatpush.msra.mxu0 0.0
      %196 = vmatpush.msra.mxu0 %v159
      %197 = vmatpush.msra.mxu0 %v158
      %198 = vmatpush.msra.mxu0 %v157
      %199 = vmatpush.msra.mxu0 %v156
      %200 = vmatpush.msra.mxu0 %v155
      %201 = vmatmul.f32.gmra.mxu0 %v162
      %v202 = vpop.f32.mrf.mxu0
      %v203 = vadd.f32 0.0, %v202
      %204 = vmatmul.f32.gmra.mxu0 %v165
      %v205 = vpop.f32.mrf.mxu0
      %v206 = vadd.f32 0.0, %v205
      %207 = vmatmul.f32.gmra.mxu0 %v168
      %v208 = vpop.f32.mrf.mxu0
      %v209 = vadd.f32 0.0, %v208
      %210 = vmatmul.f32.gmra.mxu0 %v171
      %v211 = vpop.f32.mrf.mxu0
      %v212 = vadd.f32 0.0, %v211
      %213 = vmatmul.f32.gmra.mxu0 %v174
      %v214 = vpop.f32.mrf.mxu0
      %v215 = vadd.f32 0.0, %v214
      %216 = vmatmul.f32.gmra.mxu0 %v177
      %v217 = vpop.f32.mrf.mxu0
      %v218 = vadd.f32 0.0, %v217
      %219 = vmatmul.f32.gmra.mxu0 %v180
      %v220 = vpop.f32.mrf.mxu0
      %v221 = vadd.f32 0.0, %v220
      %222 = vmatmul.f32.gmra.mxu0 %v183
      %v223 = vpop.f32.mrf.mxu0
      %v224 = vadd.f32 0.0, %v223
      %225 = vdwg.mxu0
      %vm226 = vcmask 523264
      %227 = vst.msk [vmem:[%s145] sm:$0xff] %vm226, %v203
      %228 = vst.msk [vmem:[%s145 + $0x8] sm:$0xff] %vm226, %v206
      %229 = vst.msk [vmem:[%s145 + $0x10] sm:$0xff] %vm226, %v209
      %230 = vst.msk [vmem:[%s145 + $0x18] sm:$0xff] %vm226, %v212
      %231 = vst.msk [vmem:[%s145 + $0x20] sm:$0xff] %vm226, %v215
      %232 = vst.msk [vmem:[%s145 + $0x28] sm:$0xff] %vm226, %v218
      %233 = vst.msk [vmem:[%s145 + $0x30] sm:$0xff] %vm226, %v221
      %234 = vst.msk [vmem:[%s145 + $0x38] sm:$0xff] %vm226, %v224
      %s235 = smul.u32 8, %s13
      %p236 = scmp.lt.s32.totalorder %s235, 15
      %s237 = scalar_select %p236, %s235, 15
      %s238 = smul.addr %s237, 8
      %s239 = scalar_lea.vmem %s2, %s238
      // Predicated region
      $region29: #{sparse_conv3d_forward.7} parent=27 // pred_check
        %p240 = pneg %p78
      $region30: #{sparse_conv3d_forward.7} parent=27 // pred_check_branch
        %242 = sbr.rel (%p240) target = $region32
      $region31: #{sparse_conv3d_forward.7} parent=27 // pred_region
        %s243 = smul.u32 8, %s13
      $region32: #{sparse_conv3d_forward.7} parent=27 // pred_fallthru
        _
    $region28: #{sparse_conv3d_forward.7} parent=5 // pred_fallthru
      _
    %p244 = scmp.le.s32.totalorder 2, %s8
    // Predicated region
    $region33: #{sparse_conv3d_forward.7} parent=5 // pred_check
      %p245 = pneg %p244
    $region34: #{sparse_conv3d_forward.7} parent=5 // pred_check_branch
      %247 = sbr.rel (%p245) target = $region36
    $region35: #{sparse_conv3d_forward.7} parent=5 // pred_region
      %s248 = ssub.s32 %s8, 2
      // Predicated region
      $region37: #{sparse_conv3d_forward.7} parent=35 // pred_check
        %p249 = pneg %p84
      $region38: #{sparse_conv3d_forward.7} parent=35 // pred_check_branch
        %251 = sbr.rel (%p249) target = $region40
      $region39: #{sparse_conv3d_forward.7} parent=35 // pred_region
        %s252 = smul.u32 8, %s14
        %p253 = scmp.lt.s32.totalorder %s252, 15
        %s254 = scalar_select %p253, %s252, 15
        %s255 = smul.addr %s254, 8
        %s256 = scalar_lea.vmem %s2, %s255
      $region40: #{sparse_conv3d_forward.7} parent=35 // pred_fallthru
        _
    $region36: #{sparse_conv3d_forward.7} parent=5 // pred_fallthru
      _
  $region6: #{sparse_conv3d_forward.7} parent=0 // loop_footer
    %s12 = sadd.s32 1, %s8
  $region7: #{sparse_conv3d_forward.7} parent=0 // loop_footer_branch
    %7 = sbr.rel target = $region3
  $region8: #{sparse_conv3d_forward.7} parent=0 // loop_exit
    _

// kernel: tile.18
$region0: #{tile.18}
  #allocation0 [shape = 's32[1]{0}', space=sflag, size = 0x4, scoped, tag = 'scoped memory for tile.18']
  %s0 = inlined_call_operand.vmem [shape: f32[8], index: 0, kind: input, shape index: {}]
  %s1 = inlined_call_operand.vmem [shape: f32[16,8], index: 1, kind: output, shape index: {}]
  // Predicated region
  $region2: #{tile.18} parent=0 // pred_check
    _
  $region3: #{tile.18} parent=0 // pred_check_branch
    %3 = sbr.rel (0) target = $region5
  $region4: #{tile.18} parent=0 // pred_region
    _
  $region5: #{tile.18} parent=0 // pred_fallthru
    _
  %v4 = vld [vmem:[%s0] ss:$0 sm:$0xff]
  %5 = vst [vmem:[%s1] sm:$0xff] %v4
  %s6 = scalar_lea.vmem %s1, 8
  %7 = vst [vmem:[%s6] sm:$0xff] %v4

// kernel: tile.19
$region0: #{tile.19}
  %s0 = inlined_call_operand.vmem [shape: f32[16,8], index: 0, kind: input, shape index: {}]
  %s1 = inlined_call_operand.vmem [shape: f32[1,128], index: 1, kind: output, shape index: {}]
  $region1: #{tile.19} parent=0
    #allocation0 [shape = 'u8[4096]{0}', space=vmem, size = 0x1000, scoped, tag = 'scoped mem for output reshape']
    %v2 = vld [vmem:[%s0] sm:$0x1]
    %vm3 = vcmask 64512
    %4 = vst.msk [vmem:[#allocation0] sm:$0x1] %vm3, %v2
    %s5 = scalar_lea.vmem %s0, 15
    %v6 = vld [vmem:[%s5] sm:$0x1]
    %7 = vrot.lane.b32.xlu0 %v6, 120
    %v8 = vpop.permute.xlu0 %7
    %vm9 = vcmask 1048512
    %10 = vst.msk [vmem:[#allocation0] sm:$0x1] %vm9, %v8
    %s11 = scalar_lea.vmem %s0, 14
    %v12 = vld [vmem:[%s11] sm:$0x1]
    %13 = vrot.lane.b32.xlu0 %v12, 112
    %v14 = vpop.permute.xlu0 %13
    %vm15 = vcmask 982912
    %16 = vst.msk [vmem:[#allocation0] sm:$0x1] %vm15, %v14
    %s17 = scalar_lea.vmem %s0, 13
    %v18 = vld [vmem:[%s17] sm:$0x1]
    %19 = vrot.lane.b32.xlu0 %v18, 104
    %v20 = vpop.permute.xlu0 %19
    %vm21 = vcmask 917312
    %22 = vst.msk [vmem:[#allocation0] sm:$0x1] %vm21, %v20
    %s23 = scalar_lea.vmem %s0, 12
    %v24 = vld [vmem:[%s23] sm:$0x1]
    %25 = vrot.lane.b32.xlu0 %v24, 96
    %v26 = vpop.permute.xlu0 %25
    %vm27 = vcmask 851712
    %28 = vst.msk [vmem:[#allocation0] sm:$0x1] %vm27, %v26
    %s29 = scalar_lea.vmem %s0, 11
    %v30 = vld [vmem:[%s29] sm:$0x1]
    %31 = vrot.lane.b32.xlu0 %v30, 88
    %v32 = vpop.permute.xlu0 %31
    %vm33 = vcmask 786112
    %34 = vst.msk [vmem:[#allocation0] sm:$0x1] %vm33, %v32
    %s35 = scalar_lea.vmem %s0, 10
    %v36 = vld [vmem:[%s35] sm:$0x1]
    %37 = vrot.lane.b32.xlu0 %v36, 80
    %v38 = vpop.permute.xlu0 %37
    %vm39 = vcmask 720512
    %40 = vst.msk [vmem:[#allocation0] sm:$0x1] %vm39, %v38
    %s41 = scalar_lea.vmem %s0, 9
    %v42 = vld [vmem:[%s41] sm:$0x1]
    %43 = vrot.lane.b32.xlu0 %v42, 72
    %v44 = vpop.permute.xlu0 %43
    %vm45 = vcmask 654912
    %46 = vst.msk [vmem:[#allocation0] sm:$0x1] %vm45, %v44
    %s47 = scalar_lea.vmem %s0, 8
    %v48 = vld [vmem:[%s47] sm:$0x1]
    %49 = vrot.lane.b32.xlu0 %v48, 64
    %v50 = vpop.permute.xlu0 %49
    %vm51 = vcmask 589312
    %52 = vst.msk [vmem:[#allocation0] sm:$0x1] %vm51, %v50
    %s53 = scalar_lea.vmem %s0, 7
    %v54 = vld [vmem:[%s53] sm:$0x1]
    %55 = vrot.lane.b32.xlu0 %v54, 56
    %v56 = vpop.permute.xlu0 %55
    %vm57 = vcmask 523712
    %58 = vst.msk [vmem:[#allocation0] sm:$0x1] %vm57, %v56
    %s59 = scalar_lea.vmem %s0, 6
    %v60 = vld [vmem:[%s59] sm:$0x1]
    %61 = vrot.lane.b32.xlu0 %v60, 48
    %v62 = vpop.permute.xlu0 %61
    %vm63 = vcmask 458112
    %64 = vst.msk [vmem:[#allocation0] sm:$0x1] %vm63, %v62
    %s65 = scalar_lea.vmem %s0, 5
    %v66 = vld [vmem:[%s65] sm:$0x1]
    %67 = vrot.lane.b32.xlu0 %v66, 40
    %v68 = vpop.permute.xlu0 %67
    %vm69 = vcmask 392512
    %70 = vst.msk [vmem:[#allocation0] sm:$0x1] %vm69, %v68
    %s71 = scalar_lea.vmem %s0, 4
    %v72 = vld [vmem:[%s71] sm:$0x1]
    %73 = vrot.lane.b32.xlu0 %v72, 32
    %v74 = vpop.permute.xlu0 %73
    %vm75 = vcmask 326912
    %76 = vst.msk [vmem:[#allocation0] sm:$0x1] %vm75, %v74
    %s77 = scalar_lea.vmem %s0, 3
    %v78 = vld [vmem:[%s77] sm:$0x1]
    %79 = vrot.lane.b32.xlu0 %v78, 24
    %v80 = vpop.permute.xlu0 %79
    %vm81 = vcmask 261312
    %82 = vst.msk [vmem:[#allocation0] sm:$0x1] %vm81, %v80
    %s83 = scalar_lea.vmem %s0, 2
    %v84 = vld [vmem:[%s83] sm:$0x1]
    %85 = vrot.lane.b32.xlu0 %v84, 16
    %v86 = vpop.permute.xlu0 %85
    %vm87 = vcmask 195712
    %88 = vst.msk [vmem:[#allocation0] sm:$0x1] %vm87, %v86
    %s89 = scalar_lea.vmem %s0, 1
    %v90 = vld [vmem:[%s89] sm:$0x1]
    %91 = vrot.lane.b32.xlu0 %v90, 8
    %v92 = vpop.permute.xlu0 %91
    %vm93 = vcmask 130112
    %94 = vst.msk [vmem:[#allocation0] sm:$0x1] %vm93, %v92
    %s96 = ssub.s32 2, 1
    %v97 = vld [vmem:[#allocation0] sm:%s96]
    %s99 = ssub.s32 2, 1
    %100 = vst [vmem:[%s1] sm:%s99] %v97

// kernel: sparse_conv3d_forward.8
$region0: #{sparse_conv3d_forward.8}
  #allocation0 [shape = 'u32[]', space=smem, size = 0x4, offset = 0x4, fixed_abs, tag = 'smem constant byte address 0x4 - core index']
  #allocation1 [shape = 'u32[72,128]{1,0:T(1,128)}', space=vmem, size = 0x9000, scoped, tag = 'internal scratch']
  %s0 = inlined_call_operand.vmem [shape: f32[64,128], index: 0, kind: input, shape index: {}]
  %s1 = inlined_call_operand.vmem [shape: f32[1,128], index: 1, kind: output, shape index: {0}]
  %s2 = inlined_call_operand.vmem [shape: f32[1,128], index: 2, kind: output, shape index: {1}]
  %3 = xla_tuple %s1, %s2
  %s4 = sld [smem:[#allocation0]]
  $region49: #{sparse_conv3d_forward.8} parent=0
    _
  %s6 = ssub.s32 1, %s4
  %s7 = scalar_select 0, %s6, %s4
  loop: start=0, step=1, limit=4
  $region2: #{sparse_conv3d_forward.8} parent=0 // loop_pre_header
    _
  $region3: #{sparse_conv3d_forward.8} parent=0 // loop_header
    %s9 = sphi 0, %s13
    %p10 = scmp.ge.s32.totalorder %s9, 4
    %s19 = sphi 0, %s21
    %s22 = sphi 0, %s19
    %s23 = sphi 0, %s22
    %s39 = sphi 0, %s23
    %s43 = sphi 0, %s43
    %s45 = sphi 0, %s43
    %s46 = sphi 0, %s45
    %s60 = sphi 0, %s46
    %s64 = sphi 0, %s64
    %s66 = sphi 0, %s64
    %s67 = sphi 0, %s66
    %s81 = sphi 0, %s67
  $region4: #{sparse_conv3d_forward.8} parent=0 // loop_header_branch
    %12 = sbr.rel (%p10) target = $region8
  $region5: #{sparse_conv3d_forward.8} parent=0 // loop_body
    %s14 = ssub.s32 %s9, 1
    %s15 = ssub.s32 %s9, 2
    %s16 = sadd.s32 %s9, 1
    %s17 = ssub.s32 %s9, %s16
    %p18 = scmp.eq.s32.totalorder %s17, 0
    %s20 = sadd.s32 %s19, 1
    %s21 = scalar_select %p18, %s19, %s20
    %p24 = pneg %p18
    %p25 = scmp.eq.s32.totalorder %s9, 1
    %p26 = por %p24, %p25
    %p27 = scmp.ne.s32.totalorder %s19, %s22
    %p28 = scmp.eq.s32.totalorder %s9, 0
    %p29 = por %p27, %p28
    %p30 = scmp.ne.s32.totalorder %s19, %s22
    %p31 = scmp.eq.s32.totalorder %s14, 1
    %p32 = por %p30, %p31
    %p33 = scmp.ne.s32.totalorder %s22, %s23
    %p34 = scmp.eq.s32.totalorder %s14, 0
    %p35 = por %p33, %p34
    %p36 = scmp.ne.s32.totalorder %s22, %s23
    %p37 = scmp.eq.s32.totalorder %s15, 1
    %p38 = por %p36, %p37
    %p40 = scmp.ne.s32.totalorder %s23, %s39
    %p41 = scmp.eq.s32.totalorder %s15, 0
    %p42 = por %p40, %p41
    %s44 = sadd.s32 %s43, 1
    %p47 = scmp.eq.s32.totalorder %s9, 1
    %p48 = scmp.ne.s32.totalorder %s43, %s45
    %p49 = scmp.eq.s32.totalorder %s9, 0
    %p50 = por %p48, %p49
    %p51 = scmp.ne.s32.totalorder %s43, %s45
    %p52 = scmp.eq.s32.totalorder %s14, 1
    %p53 = por %p51, %p52
    %p54 = scmp.ne.s32.totalorder %s45, %s46
    %p55 = scmp.eq.s32.totalorder %s14, 0
    %p56 = por %p54, %p55
    %p57 = scmp.ne.s32.totalorder %s45, %s46
    %p58 = scmp.eq.s32.totalorder %s15, 1
    %p59 = por %p57, %p58
    %p61 = scmp.ne.s32.totalorder %s46, %s60
    %p62 = scmp.eq.s32.totalorder %s15, 0
    %p63 = por %p61, %p62
    %s65 = sadd.s32 %s64, 1
    %p68 = scmp.eq.s32.totalorder %s9, 1
    %p69 = scmp.ne.s32.totalorder %s64, %s66
    %p70 = scmp.eq.s32.totalorder %s9, 0
    %p71 = por %p69, %p70
    %p72 = scmp.ne.s32.totalorder %s64, %s66
    %p73 = scmp.eq.s32.totalorder %s14, 1
    %p74 = por %p72, %p73
    %p75 = scmp.ne.s32.totalorder %s66, %s67
    %p76 = scmp.eq.s32.totalorder %s14, 0
    %p77 = por %p75, %p76
    %p78 = scmp.ne.s32.totalorder %s66, %s67
    %p79 = scmp.eq.s32.totalorder %s15, 1
    %p80 = por %p78, %p79
    %p82 = scmp.ne.s32.totalorder %s67, %s81
    %p83 = scmp.eq.s32.totalorder %s15, 0
    %p84 = por %p82, %p83
    %p85 = scmp.le.s32.totalorder 1, %s9
    %p86 = scmp.lt.s32.totalorder %s9, 3
    %p87 = pnand %p85, %p86
    %p88 = pneg %p87
    // Predicated region
    $region9: #{sparse_conv3d_forward.8} parent=5 // pred_check
      _
    $region10: #{sparse_conv3d_forward.8} parent=5 // pred_check_branch
      %90 = sbr.rel (%p87) target = $region12
    $region11: #{sparse_conv3d_forward.8} parent=5 // pred_region
      %s91 = ssub.s32 %s9, 1
    $region12: #{sparse_conv3d_forward.8} parent=5 // pred_fallthru
      _
    %p92 = scmp.lt.s32.totalorder %s9, 2
    // Predicated region
    $region13: #{sparse_conv3d_forward.8} parent=5 // pred_check
      %p93 = pneg %p92
    $region14: #{sparse_conv3d_forward.8} parent=5 // pred_check_branch
      %95 = sbr.rel (%p93) target = $region16
    $region15: #{sparse_conv3d_forward.8} parent=5 // pred_region
      // Predicated region
      $region17: #{sparse_conv3d_forward.8} parent=15 // pred_check
        %p96 = pneg %p29
      $region18: #{sparse_conv3d_forward.8} parent=15 // pred_check_branch
        %98 = sbr.rel (%p96) target = $region20
      $region19: #{sparse_conv3d_forward.8} parent=15 // pred_region
        %s99 = smul.u32 4, %s9
        %p100 = scmp.lt.s32.totalorder %s99, 7
        %s101 = scalar_select %p100, %s99, 7
        %s102 = smul.addr %s101, 8
        %s103 = scalar_lea.vmem %s0, %s102
        %s104 = smul.u32 4, %s9
      $region20: #{sparse_conv3d_forward.8} parent=15 // pred_fallthru
        _
    $region16: #{sparse_conv3d_forward.8} parent=5 // pred_fallthru
      _
    %p105 = scmp.le.s32.totalorder 1, %s9
    %p106 = scmp.lt.s32.totalorder %s9, 3
    %p107 = pnand %p105, %p106
    %p108 = pneg %p107
    // Predicated region
    $region21: #{sparse_conv3d_forward.8} parent=5 // pred_check
      _
    $region22: #{sparse_conv3d_forward.8} parent=5 // pred_check_branch
      %110 = sbr.rel (%p107) target = $region24
    $region23: #{sparse_conv3d_forward.8} parent=5 // pred_region
      %s111 = ssub.s32 %s9, 1
      %s112 = smul.u32 4, %s14
      %p113 = scmp.lt.s32.totalorder %s112, 7
      %s114 = scalar_select %p113, %s112, 7
      %s115 = smul.addr %s114, 8
      %s116 = scalar_lea.vmem %s0, %s115
      %p117 = pneg %p35
      %p118 = pneg %p32
      %p119 = pneg %p56
      %p120 = pneg %p53
      %p121 = pneg %p77
      %p122 = pneg %p74
      %s123 = smul.u32 4, %s14
      %p124 = scmp.lt.s32.totalorder %s123, 7
      %s125 = scalar_select %p124, %s123, 7
      %s126 = smul.addr %s125, 8
      %s127 = scalar_lea.vmem %s0, %s126
      %s128 = smul.u32 4, %s14
      %p129 = scmp.eq.s32.totalorder %s14, 0
      // Predicated region
      $region25: #{sparse_conv3d_forward.8} parent=23 // pred_check
        %p130 = pneg %p129
      $region26: #{sparse_conv3d_forward.8} parent=23 // pred_check_branch
        %132 = sbr.rel (%p130) target = $region28
      $region27: #{sparse_conv3d_forward.8} parent=23 // pred_region
        %133 = vst [vmem:[%s1] sm:$0x1] 0.0
        %134 = vst [vmem:[%s2] sm:$0x1] 0.0
      $region28: #{sparse_conv3d_forward.8} parent=23 // pred_fallthru
        _
      %v135 = vld [vmem:[%s127] sm:$0xff]
      %v136 = vld [vmem:[%s127 + $0x8] sm:$0xff]
      %v137 = vld [vmem:[%s127 + $0x10] sm:$0xff]
      %v138 = vld [vmem:[%s127 + $0x18] sm:$0xff]
      %v139 = vld [vmem:[%s1] sm:$0x1]
      %v140 = vadd.f32 %v135, %v136
      %v141 = vadd.f32 %v140, %v137
      %v142 = vadd.f32 %v141, %v138
      %v143 = vrot.slane %v142, 4
      %v144 = vadd.f32 %v142, %v143
      %v145 = vrot.slane %v144, 2
      %v146 = vadd.f32 %v144, %v145
      %v147 = vrot.slane %v146, 1
      %v148 = vadd.f32 %v146, %v147
      %v149 = vadd.f32 %v139, %v148
      %150 = vst [vmem:[%s1] sm:$0x1] %v149
      %v151 = vld [vmem:[%s2] sm:$0x1]
      %v152 = vmul.f32 %v135, %v135
      %v153 = vmul.f32 %v136, %v136
      %v154 = vmul.f32 %v137, %v137
      %v155 = vmul.f32 %v138, %v138
      %v156 = vadd.f32 %v152, %v153
      %v157 = vadd.f32 %v156, %v154
      %v158 = vadd.f32 %v157, %v155
      %v159 = vrot.slane %v158, 4
      %v160 = vadd.f32 %v158, %v159
      %v161 = vrot.slane %v160, 2
      %v162 = vadd.f32 %v160, %v161
      %v163 = vrot.slane %v162, 1
      %v164 = vadd.f32 %v162, %v163
      %v165 = vadd.f32 %v151, %v164
      %166 = vst [vmem:[%s2] sm:$0x1] %v165
      // Predicated region
      $region29: #{sparse_conv3d_forward.8} parent=23 // pred_check
        %p167 = pneg %p53
      $region30: #{sparse_conv3d_forward.8} parent=23 // pred_check_branch
        %169 = sbr.rel (%p167) target = $region32
      $region31: #{sparse_conv3d_forward.8} parent=23 // pred_region
        _
      $region32: #{sparse_conv3d_forward.8} parent=23 // pred_fallthru
        _
      // Predicated region
      $region33: #{sparse_conv3d_forward.8} parent=23 // pred_check
        %p170 = pneg %p74
      $region34: #{sparse_conv3d_forward.8} parent=23 // pred_check_branch
        %172 = sbr.rel (%p170) target = $region36
      $region35: #{sparse_conv3d_forward.8} parent=23 // pred_region
        _
      $region36: #{sparse_conv3d_forward.8} parent=23 // pred_fallthru
        _
      // Predicated region
      $region37: #{sparse_conv3d_forward.8} parent=23 // pred_check
        %p173 = pneg %p53
      $region38: #{sparse_conv3d_forward.8} parent=23 // pred_check_branch
        %175 = sbr.rel (%p173) target = $region40
      $region39: #{sparse_conv3d_forward.8} parent=23 // pred_region
        _
      $region40: #{sparse_conv3d_forward.8} parent=23 // pred_fallthru
        _
      // Predicated region
      $region41: #{sparse_conv3d_forward.8} parent=23 // pred_check
        %p176 = pneg %p74
      $region42: #{sparse_conv3d_forward.8} parent=23 // pred_check_branch
        %178 = sbr.rel (%p176) target = $region44
      $region43: #{sparse_conv3d_forward.8} parent=23 // pred_region
        _
      $region44: #{sparse_conv3d_forward.8} parent=23 // pred_fallthru
        _
    $region24: #{sparse_conv3d_forward.8} parent=5 // pred_fallthru
      _
    %p179 = scmp.le.s32.totalorder 2, %s9
    // Predicated region
    $region45: #{sparse_conv3d_forward.8} parent=5 // pred_check
      %p180 = pneg %p179
    $region46: #{sparse_conv3d_forward.8} parent=5 // pred_check_branch
      %182 = sbr.rel (%p180) target = $region48
    $region47: #{sparse_conv3d_forward.8} parent=5 // pred_region
      %s183 = ssub.s32 %s9, 2
    $region48: #{sparse_conv3d_forward.8} parent=5 // pred_fallthru
      _
  $region6: #{sparse_conv3d_forward.8} parent=0 // loop_footer
    %s13 = sadd.s32 1, %s9
  $region7: #{sparse_conv3d_forward.8} parent=0 // loop_footer_branch
    %8 = sbr.rel target = $region3
  $region8: #{sparse_conv3d_forward.8} parent=0 // loop_exit
    _

// kernel: sparse_conv3d_forward.9
$region0: #{sparse_conv3d_forward.9}
  #allocation0 [shape = 'u32[]', space=smem, size = 0x4, offset = 0x4, fixed_abs, tag = 'smem constant byte address 0x4 - core index']
  #allocation1 [shape = 'u32[72,128]{1,0:T(1,128)}', space=vmem, size = 0x9000, scoped, tag = 'internal scratch']
  %s0 = inlined_call_operand.vmem [shape: f32[64,128], index: 0, kind: input, shape index: {}]
  %s1 = inlined_call_operand.vmem [shape: f32[1,128], index: 1, kind: input, shape index: {}]
  %s2 = inlined_call_operand.vmem [shape: f32[1,128], index: 2, kind: input, shape index: {}]
  %s3 = inlined_call_operand.vmem [shape: f32[64,128], index: 3, kind: output, shape index: {}]
  %s4 = sld [smem:[#allocation0]]
  $region45: #{sparse_conv3d_forward.9} parent=0
    _
  %s6 = ssub.s32 1, %s4
  %s7 = scalar_select 0, %s6, %s4
  loop: start=0, step=1, limit=4
  $region2: #{sparse_conv3d_forward.9} parent=0 // loop_pre_header
    _
  $region3: #{sparse_conv3d_forward.9} parent=0 // loop_header
    %s9 = sphi 0, %s13
    %p10 = scmp.ge.s32.totalorder %s9, 4
    %s19 = sphi 0, %s21
    %s22 = sphi 0, %s19
    %s23 = sphi 0, %s22
    %s39 = sphi 0, %s23
    %s43 = sphi 0, %s43
    %s45 = sphi 0, %s43
    %s46 = sphi 0, %s45
    %s60 = sphi 0, %s46
    %s64 = sphi 0, %s64
    %s66 = sphi 0, %s64
    %s67 = sphi 0, %s66
    %s81 = sphi 0, %s67
    %s87 = sphi 0, %s89
    %s90 = sphi 0, %s87
    %s91 = sphi 0, %s90
    %s107 = sphi 0, %s91
  $region4: #{sparse_conv3d_forward.9} parent=0 // loop_header_branch
    %12 = sbr.rel (%p10) target = $region8
  $region5: #{sparse_conv3d_forward.9} parent=0 // loop_body
    %s14 = ssub.s32 %s9, 1
    %s15 = ssub.s32 %s9, 2
    %s16 = sadd.s32 %s9, 1
    %s17 = ssub.s32 %s9, %s16
    %p18 = scmp.eq.s32.totalorder %s17, 0
    %s20 = sadd.s32 %s19, 1
    %s21 = scalar_select %p18, %s19, %s20
    %p24 = pneg %p18
    %p25 = scmp.eq.s32.totalorder %s9, 1
    %p26 = por %p24, %p25
    %p27 = scmp.ne.s32.totalorder %s19, %s22
    %p28 = scmp.eq.s32.totalorder %s9, 0
    %p29 = por %p27, %p28
    %p30 = scmp.ne.s32.totalorder %s19, %s22
    %p31 = scmp.eq.s32.totalorder %s14, 1
    %p32 = por %p30, %p31
    %p33 = scmp.ne.s32.totalorder %s22, %s23
    %p34 = scmp.eq.s32.totalorder %s14, 0
    %p35 = por %p33, %p34
    %p36 = scmp.ne.s32.totalorder %s22, %s23
    %p37 = scmp.eq.s32.totalorder %s15, 1
    %p38 = por %p36, %p37
    %p40 = scmp.ne.s32.totalorder %s23, %s39
    %p41 = scmp.eq.s32.totalorder %s15, 0
    %p42 = por %p40, %p41
    %s44 = sadd.s32 %s43, 1
    %p47 = scmp.eq.s32.totalorder %s9, 1
    %p48 = scmp.ne.s32.totalorder %s43, %s45
    %p49 = scmp.eq.s32.totalorder %s9, 0
    %p50 = por %p48, %p49
    %p51 = scmp.ne.s32.totalorder %s43, %s45
    %p52 = scmp.eq.s32.totalorder %s14, 1
    %p53 = por %p51, %p52
    %p54 = scmp.ne.s32.totalorder %s45, %s46
    %p55 = scmp.eq.s32.totalorder %s14, 0
    %p56 = por %p54, %p55
    %p57 = scmp.ne.s32.totalorder %s45, %s46
    %p58 = scmp.eq.s32.totalorder %s15, 1
    %p59 = por %p57, %p58
    %p61 = scmp.ne.s32.totalorder %s46, %s60
    %p62 = scmp.eq.s32.totalorder %s15, 0
    %p63 = por %p61, %p62
    %s65 = sadd.s32 %s64, 1
    %p68 = scmp.eq.s32.totalorder %s9, 1
    %p69 = scmp.ne.s32.totalorder %s64, %s66
    %p70 = scmp.eq.s32.totalorder %s9, 0
    %p71 = por %p69, %p70
    %p72 = scmp.ne.s32.totalorder %s64, %s66
    %p73 = scmp.eq.s32.totalorder %s14, 1
    %p74 = por %p72, %p73
    %p75 = scmp.ne.s32.totalorder %s66, %s67
    %p76 = scmp.eq.s32.totalorder %s14, 0
    %p77 = por %p75, %p76
    %p78 = scmp.ne.s32.totalorder %s66, %s67
    %p79 = scmp.eq.s32.totalorder %s15, 1
    %p80 = por %p78, %p79
    %p82 = scmp.ne.s32.totalorder %s67, %s81
    %p83 = scmp.eq.s32.totalorder %s15, 0
    %p84 = por %p82, %p83
    %s85 = ssub.s32 %s9, %s16
    %p86 = scmp.eq.s32.totalorder %s85, 0
    %s88 = sadd.s32 %s87, 1
    %s89 = scalar_select %p86, %s87, %s88
    %p92 = pneg %p86
    %p93 = scmp.eq.s32.totalorder %s9, 1
    %p94 = por %p92, %p93
    %p95 = scmp.ne.s32.totalorder %s87, %s90
    %p96 = scmp.eq.s32.totalorder %s9, 0
    %p97 = por %p95, %p96
    %p98 = scmp.ne.s32.totalorder %s87, %s90
    %p99 = scmp.eq.s32.totalorder %s14, 1
    %p100 = por %p98, %p99
    %p101 = scmp.ne.s32.totalorder %s90, %s91
    %p102 = scmp.eq.s32.totalorder %s14, 0
    %p103 = por %p101, %p102
    %p104 = scmp.ne.s32.totalorder %s90, %s91
    %p105 = scmp.eq.s32.totalorder %s15, 1
    %p106 = por %p104, %p105
    %p108 = scmp.ne.s32.totalorder %s91, %s107
    %p109 = scmp.eq.s32.totalorder %s15, 0
    %p110 = por %p108, %p109
    %p111 = scmp.le.s32.totalorder 1, %s9
    %p112 = scmp.lt.s32.totalorder %s9, 3
    %p113 = pnand %p111, %p112
    %p114 = pneg %p113
    // Predicated region
    $region9: #{sparse_conv3d_forward.9} parent=5 // pred_check
      _
    $region10: #{sparse_conv3d_forward.9} parent=5 // pred_check_branch
      %116 = sbr.rel (%p113) target = $region12
    $region11: #{sparse_conv3d_forward.9} parent=5 // pred_region
      %s117 = ssub.s32 %s9, 1
      // Predicated region
      $region13: #{sparse_conv3d_forward.9} parent=11 // pred_check
        %p118 = pneg %p56
      $region14: #{sparse_conv3d_forward.9} parent=11 // pred_check_branch
        %120 = sbr.rel (%p118) target = $region16
      $region15: #{sparse_conv3d_forward.9} parent=11 // pred_region
        _
      $region16: #{sparse_conv3d_forward.9} parent=11 // pred_fallthru
        _
      // Predicated region
      $region17: #{sparse_conv3d_forward.9} parent=11 // pred_check
        %p121 = pneg %p77
      $region18: #{sparse_conv3d_forward.9} parent=11 // pred_check_branch
        %123 = sbr.rel (%p121) target = $region20
      $region19: #{sparse_conv3d_forward.9} parent=11 // pred_region
        _
      $region20: #{sparse_conv3d_forward.9} parent=11 // pred_fallthru
        _
    $region12: #{sparse_conv3d_forward.9} parent=5 // pred_fallthru
      _
    %p124 = scmp.lt.s32.totalorder %s9, 2
    // Predicated region
    $region21: #{sparse_conv3d_forward.9} parent=5 // pred_check
      %p125 = pneg %p124
    $region22: #{sparse_conv3d_forward.9} parent=5 // pred_check_branch
      %127 = sbr.rel (%p125) target = $region24
    $region23: #{sparse_conv3d_forward.9} parent=5 // pred_region
      // Predicated region
      $region25: #{sparse_conv3d_forward.9} parent=23 // pred_check
        %p128 = pneg %p29
      $region26: #{sparse_conv3d_forward.9} parent=23 // pred_check_branch
        %130 = sbr.rel (%p128) target = $region28
      $region27: #{sparse_conv3d_forward.9} parent=23 // pred_region
        %s131 = smul.u32 4, %s9
        %p132 = scmp.lt.s32.totalorder %s131, 7
        %s133 = scalar_select %p132, %s131, 7
        %s134 = smul.addr %s133, 8
        %s135 = scalar_lea.vmem %s0, %s134
        %s136 = smul.u32 4, %s9
      $region28: #{sparse_conv3d_forward.9} parent=23 // pred_fallthru
        _
    $region24: #{sparse_conv3d_forward.9} parent=5 // pred_fallthru
      _
    %p137 = scmp.le.s32.totalorder 1, %s9
    %p138 = scmp.lt.s32.totalorder %s9, 3
    %p139 = pnand %p137, %p138
    %p140 = pneg %p139
    // Predicated region
    $region29: #{sparse_conv3d_forward.9} parent=5 // pred_check
      _
    $region30: #{sparse_conv3d_forward.9} parent=5 // pred_check_branch
      %142 = sbr.rel (%p139) target = $region32
    $region31: #{sparse_conv3d_forward.9} parent=5 // pred_region
      %s143 = ssub.s32 %s9, 1
      %s144 = smul.u32 4, %s14
      %p145 = scmp.lt.s32.totalorder %s144, 7
      %s146 = scalar_select %p145, %s144, 7
      %s147 = smul.addr %s146, 8
      %s148 = scalar_lea.vmem %s0, %s147
      %p149 = pneg %p35
      %p150 = pneg %p32
      %p151 = pneg %p56
      %p152 = pneg %p53
      %p153 = pneg %p77
      %p154 = pneg %p74
      %p155 = pneg %p103
      %p156 = pneg %p100
      %s157 = smul.u32 4, %s14
      %p158 = scmp.lt.s32.totalorder %s157, 7
      %s159 = scalar_select %p158, %s157, 7
      %s160 = smul.addr %s159, 8
      %s161 = scalar_lea.vmem %s3, %s160
      %s162 = smul.u32 4, %s14
      %p163 = scmp.lt.s32.totalorder %s162, 7
      %s164 = scalar_select %p163, %s162, 7
      %s165 = smul.addr %s164, 8
      %s166 = scalar_lea.vmem %s0, %s165
      %s167 = smul.u32 4, %s14
      %s168 = smul.u32 4, %s14
      %p169 = scmp.lt.s32.totalorder %s168, 7
      %s170 = scalar_select %p169, %s168, 7
      %s171 = smul.addr %s170, 8
      %s172 = scalar_lea.vmem %s3, %s171
      %s173 = smul.u32 4, %s14
      %v174 = vld [vmem:[%s166] sm:$0xff]
      %v175 = vld [vmem:[%s166 + $0x8] sm:$0xff]
      %v176 = vld [vmem:[%s166 + $0x10] sm:$0xff]
      %v177 = vld [vmem:[%s166 + $0x18] sm:$0xff]
      %v178 = vld [vmem:[%s1] sm:$0x1]
      %v180 = vperm.slane %v178, 0
      %v182 = vmul.f32 %v174, %v180
      %v183 = vmul.f32 %v175, %v180
      %v184 = vmul.f32 %v176, %v180
      %v185 = vmul.f32 %v177, %v180
      %v186 = vld [vmem:[%s2] sm:$0x1]
      %v188 = vperm.slane %v186, 0
      %v190 = vadd.f32 %v182, %v188
      %v191 = vadd.f32 %v183, %v188
      %v192 = vadd.f32 %v184, %v188
      %v193 = vadd.f32 %v185, %v188
      %v194 = vmax.f32 %v190, 0.0
      %v195 = vmax.f32 %v191, 0.0
      %v196 = vmax.f32 %v192, 0.0
      %v197 = vmax.f32 %v193, 0.0
      %198 = vst [vmem:[%s172] sm:$0xff] %v194
      %199 = vst [vmem:[%s172 + $0x8] sm:$0xff] %v195
      %200 = vst [vmem:[%s172 + $0x10] sm:$0xff] %v196
      %201 = vst [vmem:[%s172 + $0x18] sm:$0xff] %v197
      %s202 = smul.u32 4, %s14
      %p203 = scmp.lt.s32.totalorder %s202, 7
      %s204 = scalar_select %p203, %s202, 7
      %s205 = smul.addr %s204, 8
      %s206 = scalar_lea.vmem %s3, %s205
      // Predicated region
      $region33: #{sparse_conv3d_forward.9} parent=31 // pred_check
        %p207 = pneg %p100
      $region34: #{sparse_conv3d_forward.9} parent=31 // pred_check_branch
        %209 = sbr.rel (%p207) target = $region36
      $region35: #{sparse_conv3d_forward.9} parent=31 // pred_region
        %s210 = smul.u32 4, %s14
      $region36: #{sparse_conv3d_forward.9} parent=31 // pred_fallthru
        _
    $region32: #{sparse_conv3d_forward.9} parent=5 // pred_fallthru
      _
    %p211 = scmp.le.s32.totalorder 2, %s9
    // Predicated region
    $region37: #{sparse_conv3d_forward.9} parent=5 // pred_check
      %p212 = pneg %p211
    $region38: #{sparse_conv3d_forward.9} parent=5 // pred_check_branch
      %214 = sbr.rel (%p212) target = $region40
    $region39: #{sparse_conv3d_forward.9} parent=5 // pred_region
      %s215 = ssub.s32 %s9, 2
      // Predicated region
      $region41: #{sparse_conv3d_forward.9} parent=39 // pred_check
        %p216 = pneg %p106
      $region42: #{sparse_conv3d_forward.9} parent=39 // pred_check_branch
        %218 = sbr.rel (%p216) target = $region44
      $region43: #{sparse_conv3d_forward.9} parent=39 // pred_region
        %s219 = smul.u32 4, %s15
        %p220 = scmp.lt.s32.totalorder %s219, 7
        %s221 = scalar_select %p220, %s219, 7
        %s222 = smul.addr %s221, 8
        %s223 = scalar_lea.vmem %s3, %s222
      $region44: #{sparse_conv3d_forward.9} parent=39 // pred_fallthru
        _
    $region40: #{sparse_conv3d_forward.9} parent=5 // pred_fallthru
      _
  $region6: #{sparse_conv3d_forward.9} parent=0 // loop_footer
    %s13 = sadd.s32 1, %s9
  $region7: #{sparse_conv3d_forward.9} parent=0 // loop_footer_branch
    %8 = sbr.rel target = $region3
  $region8: #{sparse_conv3d_forward.9} parent=0 // loop_exit
    _

</llo_original>
